<compile_context>
chip_gen: v5e
topology: v5e:2x2
jax: 0.10.0
libtpu: 0.0.40
codegen_flags: <defaults>
</compile_context>

<pallas_src>
import math
import functools

import jax
import jax.numpy as jnp
from jax.experimental import pallas as pl
from jax.experimental.pallas import tpu as pltpu


def _round_up(x: int, m: int) -> int:
    return ((x + m - 1) // m) * m


def _anchor_agg_kernel(w_ref, x_ref, o_ref, acc_ref):
    k = pl.program_id(2)

    @pl.when(k == 0)
    def _():
        acc_ref[...] = jnp.zeros_like(acc_ref)

    # MXU matmul in bf16 (or whatever mxu dtype the wrapper chose), f32 accumulate.
    acc_ref[...] += jnp.dot(
        w_ref[...], x_ref[...], preferred_element_type=jnp.float32
    )

    @pl.when(k == pl.num_programs(2) - 1)
    def _():
        acc = acc_ref[...]
        out = jnp.where(acc >= 0, acc, jnp.float32(0.1) * acc)  # LeakyReLU(0.1), f32
        o_ref[...] = out.astype(o_ref.dtype)


@functools.partial(jax.jit, static_argnames=("tm", "tn", "tk", "mxu_dtype"))
def anchor_aggregation(
    weight: jax.Array,
    x: jax.Array,
    *,
    tm: int = 128,
    tn: int = 128,
    tk: int = 512,
    mxu_dtype=jnp.bfloat16,
) -> jax.Array:
    """weight: (anchor_num, n_number), x: (n_number, feat) -> (anchor_num, feat)."""
    M, K = weight.shape
    K2, F = x.shape
    assert K == K2, "contraction dim mismatch"
    out_dtype = x.dtype

    # Feed the MXU narrow (bf16) inputs; accumulate in f32 inside the kernel.
    w = weight.astype(mxu_dtype)
    xx = x.astype(mxu_dtype)

    # Tile sizes clamped to the (padded) problem, keeping TPU layout alignment:
    #   sublane dims (tm, tk-as-rows) -> multiples of 16 (safe for bf16 packing)
    #   lane dims    (tk-as-cols, tn) -> multiples of 128
    tm_ = min(tm, _round_up(M, 16))
    tn_ = min(tn, _round_up(F, 128))
    tk_ = min(tk, _round_up(K, 128))

    Mp = _round_up(M, tm_)
    Fp = _round_up(F, tn_)
    Kp = _round_up(K, tk_)

    if (Mp, Kp) != (M, K):
        w = jnp.pad(w, ((0, Mp - M), (0, Kp - K)))
    if (Kp, Fp) != (K, F):
        xx = jnp.pad(xx, ((0, Kp - K), (0, Fp - F)))

    grid = (Mp // tm_, Fp // tn_, Kp // tk_)
    bytes_in = jnp.dtype(mxu_dtype).itemsize
    bytes_out = jnp.dtype(out_dtype).itemsize

    out_padded = pl.pallas_call(
        _anchor_agg_kernel,
        out_shape=jax.ShapeDtypeStruct((Mp, Fp), out_dtype),
        grid_spec=pltpu.PrefetchScalarGridSpec(
            num_scalar_prefetch=0,
            grid=grid,
            in_specs=[
                pl.BlockSpec((tm_, tk_), lambda i, j, k: (i, k)),
                pl.BlockSpec((tk_, tn_), lambda i, j, k: (k, j)),
            ],
            out_specs=pl.BlockSpec((tm_, tn_), lambda i, j, k: (i, j)),
            scratch_shapes=[pltpu.VMEM((tm_, tn_), jnp.float32)],
        ),
        compiler_params=pltpu.CompilerParams(
            dimension_semantics=("parallel", "parallel", "arbitrary"),
        ),
        cost_estimate=pl.CostEstimate(
            flops=2 * Mp * Kp * Fp,
            transcendentals=0,
            bytes_accessed=(Mp * Kp + Kp * Fp) * bytes_in + Mp * Fp * bytes_out,
        ),
    )(w, xx)

    if (Mp, Fp) != (M, F):
        out_padded = out_padded[:M, :F]
    return out_padded


def xavier_uniform(key, shape, dtype=jnp.float32):
    # Matches torch.nn.init.xavier_uniform_ for a 2-D tensor:
    # fan_out = shape[0], fan_in = shape[1], bound = sqrt(6 / (fan_in + fan_out))
    fan_out, fan_in = shape
    bound = math.sqrt(6.0 / (fan_in + fan_out))
    return jax.random.uniform(key, shape, dtype=dtype, minval=-bound, maxval=bound)


def reference_bf16(weight, x):
    # Same numerics as the kernel: bf16 MXU feed, f32 accumulation, LeakyReLU(0.1).
    out = jnp.dot(
        weight.astype(jnp.bfloat16),
        x.astype(jnp.bfloat16),
        preferred_element_type=jnp.float32,
    )
    return jnp.where(out >= 0, out, 0.1 * out).astype(x.dtype)


if __name__ == "__main__":
    anchor_num = 32    # number of anchors
    n_number = 512     # number of nodes
    feat = 256         # per-node feature dim (lane-dense: multiple of 128)

    key = jax.random.PRNGKey(0)
    k_w, k_x = jax.random.split(key)

    weight = xavier_uniform(k_w, (anchor_num, n_number))          # learnable param
    x = jax.random.normal(k_x, (n_number, feat), dtype=jnp.float32)

    out = jax.block_until_ready(anchor_aggregation(weight, x))

    ref = reference_bf16(weight, x)
    assert out.shape == (anchor_num, feat)
    # bf16 MXU feed -> loosened tolerance vs the pure-f32 check (f32 accumulation kept).
    assert jnp.allclose(out, ref, atol=1e-3, rtol=1e-3), float(
        jnp.max(jnp.abs(out - ref))
    )

    print("KERNEL_OK")
</pallas_src>

<mosaic_0001>
module attributes {stable_mosaic.version = 11 : i64} {
  func.func @_anchor_agg_kernel(%arg0: i32, %arg1: i32, %arg2: i32, %arg3: memref<32x512xbf16, #tpu.memory_space<vmem>>, %arg4: memref<512x128xbf16, #tpu.memory_space<vmem>>, %arg5: memref<32x128xf32, #tpu.memory_space<vmem>>, %arg6: memref<32x128xf32, #tpu.memory_space<vmem>>) attributes {dimension_semantics = [#tpu.dimension_semantics<parallel>, #tpu.dimension_semantics<parallel>, #tpu.dimension_semantics<arbitrary>], iteration_bounds = array<i64: 1, 2, 1>, scalar_prefetch = 0 : i64, scratch_operands = 1 : i64, tpu.core_type = #tpu.core_type<tc>, window_params = [{transform_indices = @transform_0, window_bounds = array<i64: 32, 512>}, {transform_indices = @transform_1, window_bounds = array<i64: 512, 128>}, {transform_indices = @transform_2, window_bounds = array<i64: 32, 128>}]} {
    %c0_i32 = arith.constant 0 : i32
    %0 = arith.cmpi eq, %arg2, %c0_i32 : i32
    %1 = arith.extui %0 : i1 to i32
    %c0_i32_0 = arith.constant 0 : i32
    %2 = arith.cmpi ne, %1, %c0_i32_0 : i32
    scf.if %2 {
      %cst_10 = arith.constant 0.000000e+00 : f32
      %12 = vector.broadcast %cst_10 : f32 to vector<32x128xf32>
      %c0_11 = arith.constant 0 : index
      %c0_12 = arith.constant 0 : index
      %13 = vector.load %arg6[%c0_11, %c0_12] : memref<32x128xf32, #tpu.memory_space<vmem>>, vector<32x128xf32>
      tpu.vector_store %arg6[%c0_11, %c0_12], %12 {strides = array<i32>} : memref<32x128xf32, #tpu.memory_space<vmem>>, vector<32x128xf32>,
    } else {
    }
    %c0 = arith.constant 0 : index
    %c0_1 = arith.constant 0 : index
    %3 = vector.load %arg6[%c0, %c0_1] : memref<32x128xf32, #tpu.memory_space<vmem>>, vector<32x128xf32>
    %c0_2 = arith.constant 0 : index
    %c0_3 = arith.constant 0 : index
    %4 = vector.load %arg3[%c0_2, %c0_3] : memref<32x512xbf16, #tpu.memory_space<vmem>>, vector<32x512xbf16>
    %c0_4 = arith.constant 0 : index
    %c0_5 = arith.constant 0 : index
    %5 = vector.load %arg4[%c0_4, %c0_5] : memref<512x128xbf16, #tpu.memory_space<vmem>>, vector<512x128xbf16>
    %cst = arith.constant dense<0.000000e+00> : vector<32x128xf32>
    %6 = tpu.matmul %4, %5, %cst {dimension_numbers = #tpu.dot_dimension_numbers<[1], [0], [0], [1], [0, 0, 1, 1], [], []>} : vector<32x512xbf16>, vector<512x128xbf16>, vector<32x128xf32> -> vector<32x128xf32>
    %7 = arith.addf %3, %6 : vector<32x128xf32>
    %c0_6 = arith.constant 0 : index
    %c0_7 = arith.constant 0 : index
    %8 = vector.load %arg6[%c0_6, %c0_7] : memref<32x128xf32, #tpu.memory_space<vmem>>, vector<32x128xf32>
    tpu.vector_store %arg6[%c0_6, %c0_7], %7 {strides = array<i32>} : memref<32x128xf32, #tpu.memory_space<vmem>>, vector<32x128xf32>,
    %c0_i32_8 = arith.constant 0 : i32
    %9 = arith.cmpi eq, %arg2, %c0_i32_8 : i32
    %10 = arith.extui %9 : i1 to i32
    %c0_i32_9 = arith.constant 0 : i32
    %11 = arith.cmpi ne, %10, %c0_i32_9 : i32
    scf.if %11 {
      %c0_10 = arith.constant 0 : index
      %c0_11 = arith.constant 0 : index
      %12 = vector.load %arg6[%c0_10, %c0_11] : memref<32x128xf32, #tpu.memory_space<vmem>>, vector<32x128xf32>
      %cst_12 = arith.constant 0.000000e+00 : f32
      %13 = vector.broadcast %cst_12 : f32 to vector<32x128xf32>
      %14 = arith.cmpf oge, %12, %13 : vector<32x128xf32>
      %cst_13 = arith.constant 1.000000e-01 : f32
      %15 = vector.broadcast %cst_13 : f32 to vector<32x128xf32>
      %16 = arith.mulf %15, %12 : vector<32x128xf32>
      %17 = arith.select %14, %12, %16 : vector<32x128xi1>, vector<32x128xf32>
      %c0_14 = arith.constant 0 : index
      %c0_15 = arith.constant 0 : index
      %18 = vector.load %arg5[%c0_14, %c0_15] : memref<32x128xf32, #tpu.memory_space<vmem>>, vector<32x128xf32>
      tpu.vector_store %arg5[%c0_14, %c0_15], %17 {strides = array<i32>} : memref<32x128xf32, #tpu.memory_space<vmem>>, vector<32x128xf32>,
    } else {
    }
    return
  }
  func.func @transform_0(%arg0: i32, %arg1: i32, %arg2: i32) -> (i32, i32) {
    %c0_i32 = arith.constant 0 : i32
    return %arg0, %arg2 : i32, i32
  }
  func.func @transform_1(%arg0: i32, %arg1: i32, %arg2: i32) -> (i32, i32) {
    %c0_i32 = arith.constant 0 : i32
    return %arg2, %arg1 : i32, i32
  }
  func.func @transform_2(%arg0: i32, %arg1: i32, %arg2: i32) -> (i32, i32) {
    %c0_i32 = arith.constant 0 : i32
    return %arg0, %arg1 : i32, i32
  }
}

</mosaic_0001>

<llo_original>
// kernel: anchor_aggregation.1
$region0: #{anchor_aggregation.1}
  #allocation0 [shape = 'u32[]', space=smem, size = 0x4, offset = 0x4, fixed_abs, tag = 'smem constant byte address 0x4 - core index']
  #allocation1 [shape = 'u32[72,128]{1,0:T(1,128)}', space=vmem, size = 0x9000, scoped, tag = 'internal scratch']
  #allocation2 [shape = 'f32[32,128]{1,0:T(8,128)}', space=vmem, size = 0x4000, scoped, tag = 'scratch operand']
  %s0 = inlined_call_operand.vmem [shape: bf16[32,512], index: 0, kind: input, shape index: {}]
  %s1 = inlined_call_operand.vmem [shape: bf16[512,256], index: 1, kind: input, shape index: {}]
  %s2 = inlined_call_operand.hbm [shape: f32[32,256], index: 2, kind: output, shape index: {}]
  %s3 = sld [smem:[#allocation0]]
  $region90: #{anchor_aggregation.1} parent=0
    _
  %s5 = ssub.s32 1, %s3
  %s6 = scalar_select 0, %s5, %s3
  $region1: #{anchor_aggregation.1} parent=0
    #allocation3 [shape = 'u8[262144]{0}', space=vmem, size = 0x40000, scoped, tag = 'input window, operand 1']
    #allocation4 [shape = 'u8[32768]{0}', space=vmem, size = 0x8000, scoped, tag = 'output window, operand 0']
    #allocation5 [shape = 's32[2]{0}', space=sflag, size = 0x8, scoped, tag = 'scoped memory for anchor_aggregation.1']
    %7 = vsyncpa [#allocation5], 0
    %s8 = scalar_lea.sflag [#allocation5], 1
    %9 = vsyncpa %s8, 0
    loop: start=0, step=1, limit=4
    $region2: #{anchor_aggregation.1} parent=1 // loop_pre_header
      _
    $region3: #{anchor_aggregation.1} parent=1 // loop_header
      %s11 = sphi 0, %s15
      %p12 = scmp.ge.s32.totalorder %s11, 4
      %s18 = sphi 0, %s37
      %s19 = sphi 0, %s33
      %s20 = sphi 0, %s29
      %s21 = sphi 0, %s18
      %s22 = sphi 0, %s19
      %s23 = sphi 0, %s20
      %s24 = sphi 0, %s21
      %s25 = sphi 0, %s22
      %s26 = sphi 0, %s23
      %s42 = sphi 0, %s44
      %s45 = sphi 0, %s42
      %s46 = sphi 0, %s45
      %s62 = sphi 0, %s46
      %s70 = sphi 0, %s72
      %s73 = sphi 0, %s70
      %s74 = sphi 0, %s73
      %s90 = sphi 0, %s74
      %s98 = sphi 0, %s100
      %s101 = sphi 0, %s98
      %s102 = sphi 0, %s101
      %s118 = sphi 0, %s102
    $region4: #{anchor_aggregation.1} parent=1 // loop_header_branch
      %14 = sbr.rel (%p12) target = $region8
    $region5: #{anchor_aggregation.1} parent=1 // loop_body
      %s16 = ssub.s32 %s11, 1
      %s17 = ssub.s32 %s11, 2
      %s27 = sadd.s32 1, %s20
      %p28 = scmp.ge.s32.totalorder %s27, 1
      %s29 = scalar_select %p28, 0, %s27
      %s30 = sadd.s32 1, %s19
      %s31 = scalar_select %p28, %s30, %s19
      %p32 = scmp.ge.s32.totalorder %s31, 2
      %s33 = scalar_select %p32, 0, %s31
      %s34 = sadd.s32 1, %s18
      %s35 = scalar_select %p32, %s34, %s18
      %p36 = scmp.ge.s32.totalorder %s35, 1
      %s37 = scalar_select %p36, 0, %s35
      %s38 = ssub.s32 %s18, %s37
      %s39 = ssub.s32 %s20, %s29
      %s40 = sor.u32 %s38, %s39
      %p41 = scmp.eq.s32.totalorder %s40, 0
      %s43 = sadd.s32 %s42, 1
      %s44 = scalar_select %p41, %s42, %s43
      %p47 = pneg %p41
      %p48 = scmp.eq.s32.totalorder %s11, 1
      %p49 = por %p47, %p48
      %p50 = scmp.ne.s32.totalorder %s42, %s45
      %p51 = scmp.eq.s32.totalorder %s11, 0
      %p52 = por %p50, %p51
      %p53 = scmp.ne.s32.totalorder %s42, %s45
      %p54 = scmp.eq.s32.totalorder %s16, 1
      %p55 = por %p53, %p54
      %p56 = scmp.ne.s32.totalorder %s45, %s46
      %p57 = scmp.eq.s32.totalorder %s16, 0
      %p58 = por %p56, %p57
      %p59 = scmp.ne.s32.totalorder %s45, %s46
      %p60 = scmp.eq.s32.totalorder %s17, 1
      %p61 = por %p59, %p60
      %p63 = scmp.ne.s32.totalorder %s46, %s62
      %p64 = scmp.eq.s32.totalorder %s17, 0
      %p65 = por %p63, %p64
      %s66 = ssub.s32 %s20, %s29
      %s67 = ssub.s32 %s19, %s33
      %s68 = sor.u32 %s66, %s67
      %p69 = scmp.eq.s32.totalorder %s68, 0
      %s71 = sadd.s32 %s70, 1
      %s72 = scalar_select %p69, %s70, %s71
      %p75 = pneg %p69
      %p76 = scmp.eq.s32.totalorder %s11, 1
      %p77 = por %p75, %p76
      %p78 = scmp.ne.s32.totalorder %s70, %s73
      %p79 = scmp.eq.s32.totalorder %s11, 0
      %p80 = por %p78, %p79
      %p81 = scmp.ne.s32.totalorder %s70, %s73
      %p82 = scmp.eq.s32.totalorder %s16, 1
      %p83 = por %p81, %p82
      %p84 = scmp.ne.s32.totalorder %s73, %s74
      %p85 = scmp.eq.s32.totalorder %s16, 0
      %p86 = por %p84, %p85
      %p87 = scmp.ne.s32.totalorder %s73, %s74
      %p88 = scmp.eq.s32.totalorder %s17, 1
      %p89 = por %p87, %p88
      %p91 = scmp.ne.s32.totalorder %s74, %s90
      %p92 = scmp.eq.s32.totalorder %s17, 0
      %p93 = por %p91, %p92
      %s94 = ssub.s32 %s18, %s37
      %s95 = ssub.s32 %s19, %s33
      %s96 = sor.u32 %s94, %s95
      %p97 = scmp.eq.s32.totalorder %s96, 0
      %s99 = sadd.s32 %s98, 1
      %s100 = scalar_select %p97, %s98, %s99
      %p103 = pneg %p97
      %p104 = scmp.eq.s32.totalorder %s11, 1
      %p105 = por %p103, %p104
      %p106 = scmp.ne.s32.totalorder %s98, %s101
      %p107 = scmp.eq.s32.totalorder %s11, 0
      %p108 = por %p106, %p107
      %p109 = scmp.ne.s32.totalorder %s98, %s101
      %p110 = scmp.eq.s32.totalorder %s16, 1
      %p111 = por %p109, %p110
      %p112 = scmp.ne.s32.totalorder %s101, %s102
      %p113 = scmp.eq.s32.totalorder %s16, 0
      %p114 = por %p112, %p113
      %p115 = scmp.ne.s32.totalorder %s101, %s102
      %p116 = scmp.eq.s32.totalorder %s17, 1
      %p117 = por %p115, %p116
      %p119 = scmp.ne.s32.totalorder %s102, %s118
      %p120 = scmp.eq.s32.totalorder %s17, 0
      %p121 = por %p119, %p120
      %p122 = scmp.le.s32.totalorder 1, %s11
      %p123 = scmp.lt.s32.totalorder %s11, 3
      %p124 = pnand %p122, %p123
      %p125 = pneg %p124
      // Predicated region
      $region9: #{anchor_aggregation.1} parent=5 // pred_check
        _
      $region10: #{anchor_aggregation.1} parent=5 // pred_check_branch
        %127 = sbr.rel (%p124) target = $region12
      $region11: #{anchor_aggregation.1} parent=5 // pred_region
        %s128 = ssub.s32 %s11, 1
        // Predicated region
        $region13: #{anchor_aggregation.1} parent=11 // pred_check
          %p129 = pneg %p58
        $region14: #{anchor_aggregation.1} parent=11 // pred_check_branch
          %131 = sbr.rel (%p129) target = $region16
        $region15: #{anchor_aggregation.1} parent=11 // pred_region
          %s132 = smul.u32 4, %s21
          %s133 = smul.u32 4, %s23
          %p134 = scmp.lt.s32.totalorder %s132, 3
          %s135 = scalar_select %p134, %s132, 3
          %p136 = scmp.lt.s32.totalorder %s133, 3
          %s137 = scalar_select %p136, %s133, 3
          %s138 = smul.addr %s135, 4
          %s139 = sadd.s32 %s137, %s138
          %s140 = smul.addr %s139, 4
          %s141 = scalar_lea.vmem %s0, %s140
          %s142 = smul.u32 4, %s21
          %s143 = smul.u32 4, %s23
        $region16: #{anchor_aggregation.1} parent=11 // pred_fallthru
          _
      $region12: #{anchor_aggregation.1} parent=5 // pred_fallthru
        _
      %p144 = scmp.lt.s32.totalorder %s11, 2
      // Predicated region
      $region17: #{anchor_aggregation.1} parent=5 // pred_check
        %p145 = pneg %p144
      $region18: #{anchor_aggregation.1} parent=5 // pred_check_branch
        %147 = sbr.rel (%p145) target = $region20
      $region19: #{anchor_aggregation.1} parent=5 // pred_region
        // Predicated region
        $region21: #{anchor_aggregation.1} parent=19 // pred_check
          %p148 = pneg %p80
        $region22: #{anchor_aggregation.1} parent=19 // pred_check_branch
          %150 = sbr.rel (%p148) target = $region24
        $region23: #{anchor_aggregation.1} parent=19 // pred_region
          %s151 = sand.u32 %s70, 1
          %s152 = sand.u32 %s70, 1
          %s153 = smul.addr %s152, 256
          %s154 = scalar_lea.vmem [#allocation3], %s153
          %s155 = smul.u32 64, %s20
          %s156 = smul.addr %s155, 2
          %s157 = sadd.s32 %s19, %s156
          %s158 = smul.addr %s157, 4
          %s159 = scalar_lea.vmem %s1, %s158
          // Predicated region
          $region25: #{anchor_aggregation.1} parent=23 // pred_check
            _
          $region26: #{anchor_aggregation.1} parent=23 // pred_check_branch
            %161 = sbr.rel (0) target = $region28
          $region27: #{anchor_aggregation.1} parent=23 // pred_region
            // Predicated region
            $region29: #{anchor_aggregation.1} parent=27 // pred_check
              _
            $region30: #{anchor_aggregation.1} parent=27 // pred_check_branch
              %163 = sbr.rel target = $region32
            $region31: #{anchor_aggregation.1} parent=27 // pred_region
              // Predicated region
              $region44: #{anchor_aggregation.1} parent=31 // pred_check
                _
              $region45: #{anchor_aggregation.1} parent=31 // pred_check_branch
                %305 = sbr.rel (0) target = $region47
              $region46: #{anchor_aggregation.1} parent=31 // pred_region
                loop: start=0, step=1, limit=1
                $region48: #{anchor_aggregation.1} parent=46 // loop_pre_header
                  _
                $region49: #{anchor_aggregation.1} parent=46 // loop_header
                  %s307 = sphi 0, %s311
                  %p308 = scmp.ge.s32.totalorder %s307, 1
                  %s312 = sphi %s159, %s159
                  %s313 = sphi %s154, %s154
                $region50: #{anchor_aggregation.1} parent=46 // loop_header_branch
                  %310 = sbr.rel (%p308) target = $region54
                $region51: #{anchor_aggregation.1} parent=46 // loop_body
                  _
                $region52: #{anchor_aggregation.1} parent=46 // loop_footer
                  %s311 = sadd.s32 1, %s307
                $region53: #{anchor_aggregation.1} parent=46 // loop_footer_branch
                  %306 = sbr.rel target = $region49
                $region54: #{anchor_aggregation.1} parent=46 // loop_exit
                  _
                %s315 = ssub.s32 16, 1
                loop: start=0, step=1, limit=1
                $region55: #{anchor_aggregation.1} parent=46 // loop_pre_header
                  _
                $region56: #{anchor_aggregation.1} parent=46 // loop_header
                  %s317 = sphi 0, %s321
                  %p318 = scmp.ge.s32.totalorder %s317, 1
                  %s322 = sphi %s159, %s159
                  %s323 = sphi %s154, %s154
                $region57: #{anchor_aggregation.1} parent=46 // loop_header_branch
                  %320 = sbr.rel (%p318) target = $region61
                $region58: #{anchor_aggregation.1} parent=46 // loop_body
                  %v324 = vld [vmem:[%s322] sm:%s315]
                  %325 = vst [vmem:[%s323] sm:%s315] %v324
                  %v326 = vld [vmem:[%s322 + $0x8] sm:%s315]
                  %327 = vst [vmem:[%s323 + $0x4] sm:%s315] %v326
                  %v328 = vld [vmem:[%s322 + $0x10] sm:%s315]
                  %329 = vst [vmem:[%s323 + $0x8] sm:%s315] %v328
                  %v330 = vld [vmem:[%s322 + $0x18] sm:%s315]
                  %331 = vst [vmem:[%s323 + $0xc] sm:%s315] %v330
                  %v332 = vld [vmem:[%s322 + $0x20] sm:%s315]
                  %333 = vst [vmem:[%s323 + $0x10] sm:%s315] %v332
                  %v334 = vld [vmem:[%s322 + $0x28] sm:%s315]
                  %335 = vst [vmem:[%s323 + $0x14] sm:%s315] %v334
                  %v336 = vld [vmem:[%s322 + $0x30] sm:%s315]
                  %337 = vst [vmem:[%s323 + $0x18] sm:%s315] %v336
                  %v338 = vld [vmem:[%s322 + $0x38] sm:%s315]
                  %339 = vst [vmem:[%s323 + $0x1c] sm:%s315] %v338
                  %v340 = vld [vmem:[%s322 + $0x40] sm:%s315]
                  %341 = vst [vmem:[%s323 + $0x20] sm:%s315] %v340
                  %v342 = vld [vmem:[%s322 + $0x48] sm:%s315]
                  %343 = vst [vmem:[%s323 + $0x24] sm:%s315] %v342
                  %v344 = vld [vmem:[%s322 + $0x50] sm:%s315]
                  %345 = vst [vmem:[%s323 + $0x28] sm:%s315] %v344
                  %v346 = vld [vmem:[%s322 + $0x58] sm:%s315]
                  %347 = vst [vmem:[%s323 + $0x2c] sm:%s315] %v346
                  %v348 = vld [vmem:[%s322 + $0x60] sm:%s315]
                  %349 = vst [vmem:[%s323 + $0x30] sm:%s315] %v348
                  %v350 = vld [vmem:[%s322 + $0x68] sm:%s315]
                  %351 = vst [vmem:[%s323 + $0x34] sm:%s315] %v350
                  %v352 = vld [vmem:[%s322 + $0x70] sm:%s315]
                  %353 = vst [vmem:[%s323 + $0x38] sm:%s315] %v352
                  %v354 = vld [vmem:[%s322 + $0x78] sm:%s315]
                  %355 = vst [vmem:[%s323 + $0x3c] sm:%s315] %v354
                  %v356 = vld [vmem:[%s322 + $0x80] sm:%s315]
                  %357 = vst [vmem:[%s323 + $0x40] sm:%s315] %v356
                  %v358 = vld [vmem:[%s322 + $0x88] sm:%s315]
                  %359 = vst [vmem:[%s323 + $0x44] sm:%s315] %v358
                  %v360 = vld [vmem:[%s322 + $0x90] sm:%s315]
                  %361 = vst [vmem:[%s323 + $0x48] sm:%s315] %v360
                  %v362 = vld [vmem:[%s322 + $0x98] sm:%s315]
                  %363 = vst [vmem:[%s323 + $0x4c] sm:%s315] %v362
                  %v364 = vld [vmem:[%s322 + $0xa0] sm:%s315]
                  %365 = vst [vmem:[%s323 + $0x50] sm:%s315] %v364
                  %v366 = vld [vmem:[%s322 + $0xa8] sm:%s315]
                  %367 = vst [vmem:[%s323 + $0x54] sm:%s315] %v366
                  %v368 = vld [vmem:[%s322 + $0xb0] sm:%s315]
                  %369 = vst [vmem:[%s323 + $0x58] sm:%s315] %v368
                  %v370 = vld [vmem:[%s322 + $0xb8] sm:%s315]
                  %371 = vst [vmem:[%s323 + $0x5c] sm:%s315] %v370
                  %v372 = vld [vmem:[%s322 + $0xc0] sm:%s315]
                  %373 = vst [vmem:[%s323 + $0x60] sm:%s315] %v372
                  %v374 = vld [vmem:[%s322 + $0xc8] sm:%s315]
                  %375 = vst [vmem:[%s323 + $0x64] sm:%s315] %v374
                  %v376 = vld [vmem:[%s322 + $0xd0] sm:%s315]
                  %377 = vst [vmem:[%s323 + $0x68] sm:%s315] %v376
                  %v378 = vld [vmem:[%s322 + $0xd8] sm:%s315]
                  %379 = vst [vmem:[%s323 + $0x6c] sm:%s315] %v378
                  %v380 = vld [vmem:[%s322 + $0xe0] sm:%s315]
                  %381 = vst [vmem:[%s323 + $0x70] sm:%s315] %v380
                  %v382 = vld [vmem:[%s322 + $0xe8] sm:%s315]
                  %383 = vst [vmem:[%s323 + $0x74] sm:%s315] %v382
                  %v384 = vld [vmem:[%s322 + $0xf0] sm:%s315]
                  %385 = vst [vmem:[%s323 + $0x78] sm:%s315] %v384
                  %v386 = vld [vmem:[%s322 + $0xf8] sm:%s315]
                  %387 = vst [vmem:[%s323 + $0x7c] sm:%s315] %v386
                  %v388 = vld [vmem:[%s322 + $0x100] sm:%s315]
                  %389 = vst [vmem:[%s323 + $0x80] sm:%s315] %v388
                  %v390 = vld [vmem:[%s322 + $0x108] sm:%s315]
                  %391 = vst [vmem:[%s323 + $0x84] sm:%s315] %v390
                  %v392 = vld [vmem:[%s322 + $0x110] sm:%s315]
                  %393 = vst [vmem:[%s323 + $0x88] sm:%s315] %v392
                  %v394 = vld [vmem:[%s322 + $0x118] sm:%s315]
                  %395 = vst [vmem:[%s323 + $0x8c] sm:%s315] %v394
                  %v396 = vld [vmem:[%s322 + $0x120] sm:%s315]
                  %397 = vst [vmem:[%s323 + $0x90] sm:%s315] %v396
                  %v398 = vld [vmem:[%s322 + $0x128] sm:%s315]
                  %399 = vst [vmem:[%s323 + $0x94] sm:%s315] %v398
                  %v400 = vld [vmem:[%s322 + $0x130] sm:%s315]
                  %401 = vst [vmem:[%s323 + $0x98] sm:%s315] %v400
                  %v402 = vld [vmem:[%s322 + $0x138] sm:%s315]
                  %403 = vst [vmem:[%s323 + $0x9c] sm:%s315] %v402
                  %v404 = vld [vmem:[%s322 + $0x140] sm:%s315]
                  %405 = vst [vmem:[%s323 + $0xa0] sm:%s315] %v404
                  %v406 = vld [vmem:[%s322 + $0x148] sm:%s315]
                  %407 = vst [vmem:[%s323 + $0xa4] sm:%s315] %v406
                  %v408 = vld [vmem:[%s322 + $0x150] sm:%s315]
                  %409 = vst [vmem:[%s323 + $0xa8] sm:%s315] %v408
                  %v410 = vld [vmem:[%s322 + $0x158] sm:%s315]
                  %411 = vst [vmem:[%s323 + $0xac] sm:%s315] %v410
                  %v412 = vld [vmem:[%s322 + $0x160] sm:%s315]
                  %413 = vst [vmem:[%s323 + $0xb0] sm:%s315] %v412
                  %v414 = vld [vmem:[%s322 + $0x168] sm:%s315]
                  %415 = vst [vmem:[%s323 + $0xb4] sm:%s315] %v414
                  %v416 = vld [vmem:[%s322 + $0x170] sm:%s315]
                  %417 = vst [vmem:[%s323 + $0xb8] sm:%s315] %v416
                  %v418 = vld [vmem:[%s322 + $0x178] sm:%s315]
                  %419 = vst [vmem:[%s323 + $0xbc] sm:%s315] %v418
                  %v420 = vld [vmem:[%s322 + $0x180] sm:%s315]
                  %421 = vst [vmem:[%s323 + $0xc0] sm:%s315] %v420
                  %v422 = vld [vmem:[%s322 + $0x188] sm:%s315]
                  %423 = vst [vmem:[%s323 + $0xc4] sm:%s315] %v422
                  %v424 = vld [vmem:[%s322 + $0x190] sm:%s315]
                  %425 = vst [vmem:[%s323 + $0xc8] sm:%s315] %v424
                  %v426 = vld [vmem:[%s322 + $0x198] sm:%s315]
                  %427 = vst [vmem:[%s323 + $0xcc] sm:%s315] %v426
                  %v428 = vld [vmem:[%s322 + $0x1a0] sm:%s315]
                  %429 = vst [vmem:[%s323 + $0xd0] sm:%s315] %v428
                  %v430 = vld [vmem:[%s322 + $0x1a8] sm:%s315]
                  %431 = vst [vmem:[%s323 + $0xd4] sm:%s315] %v430
                  %v432 = vld [vmem:[%s322 + $0x1b0] sm:%s315]
                  %433 = vst [vmem:[%s323 + $0xd8] sm:%s315] %v432
                  %v434 = vld [vmem:[%s322 + $0x1b8] sm:%s315]
                  %435 = vst [vmem:[%s323 + $0xdc] sm:%s315] %v434
                  %v436 = vld [vmem:[%s322 + $0x1c0] sm:%s315]
                  %437 = vst [vmem:[%s323 + $0xe0] sm:%s315] %v436
                  %v438 = vld [vmem:[%s322 + $0x1c8] sm:%s315]
                  %439 = vst [vmem:[%s323 + $0xe4] sm:%s315] %v438
                  %v440 = vld [vmem:[%s322 + $0x1d0] sm:%s315]
                  %441 = vst [vmem:[%s323 + $0xe8] sm:%s315] %v440
                  %v442 = vld [vmem:[%s322 + $0x1d8] sm:%s315]
                  %443 = vst [vmem:[%s323 + $0xec] sm:%s315] %v442
                  %v444 = vld [vmem:[%s322 + $0x1e0] sm:%s315]
                  %445 = vst [vmem:[%s323 + $0xf0] sm:%s315] %v444
                  %v446 = vld [vmem:[%s322 + $0x1e8] sm:%s315]
                  %447 = vst [vmem:[%s323 + $0xf4] sm:%s315] %v446
                  %v448 = vld [vmem:[%s322 + $0x1f0] sm:%s315]
                  %449 = vst [vmem:[%s323 + $0xf8] sm:%s315] %v448
                  %v450 = vld [vmem:[%s322 + $0x1f8] sm:%s315]
                  %451 = vst [vmem:[%s323 + $0xfc] sm:%s315] %v450
                $region59: #{anchor_aggregation.1} parent=46 // loop_footer
                  %s321 = sadd.s32 1, %s317
                $region60: #{anchor_aggregation.1} parent=46 // loop_footer_branch
                  %316 = sbr.rel target = $region56
                $region61: #{anchor_aggregation.1} parent=46 // loop_exit
                  _
              $region47: #{anchor_aggregation.1} parent=31 // pred_fallthru
                _
            $region32: #{anchor_aggregation.1} parent=27 // pred_fallthru
              _
            // Predicated region
            $region33: #{anchor_aggregation.1} parent=27 // pred_check
              _
            $region34: #{anchor_aggregation.1} parent=27 // pred_check_branch
              %165 = sbr.rel (0) target = $region36
            $region35: #{anchor_aggregation.1} parent=27 // pred_region
              %s167 = ssub.s32 16, 1
              loop: start=0, step=1, limit=1
              $region37: #{anchor_aggregation.1} parent=35 // loop_pre_header
                _
              $region38: #{anchor_aggregation.1} parent=35 // loop_header
                %s169 = sphi 0, %s173
                %p170 = scmp.ge.s32.totalorder %s169, 1
                %s174 = sphi %s159, %s159
                %s175 = sphi %s154, %s154
              $region39: #{anchor_aggregation.1} parent=35 // loop_header_branch
                %172 = sbr.rel (%p170) target = $region43
              $region40: #{anchor_aggregation.1} parent=35 // loop_body
                %v176 = vld [vmem:[%s174] sm:%s167]
                %177 = vst [vmem:[%s175] sm:%s167] %v176
                %v178 = vld [vmem:[%s174 + $0x8] sm:%s167]
                %179 = vst [vmem:[%s175 + $0x4] sm:%s167] %v178
                %v180 = vld [vmem:[%s174 + $0x10] sm:%s167]
                %181 = vst [vmem:[%s175 + $0x8] sm:%s167] %v180
                %v182 = vld [vmem:[%s174 + $0x18] sm:%s167]
                %183 = vst [vmem:[%s175 + $0xc] sm:%s167] %v182
                %v184 = vld [vmem:[%s174 + $0x20] sm:%s167]
                %185 = vst [vmem:[%s175 + $0x10] sm:%s167] %v184
                %v186 = vld [vmem:[%s174 + $0x28] sm:%s167]
                %187 = vst [vmem:[%s175 + $0x14] sm:%s167] %v186
                %v188 = vld [vmem:[%s174 + $0x30] sm:%s167]
                %189 = vst [vmem:[%s175 + $0x18] sm:%s167] %v188
                %v190 = vld [vmem:[%s174 + $0x38] sm:%s167]
                %191 = vst [vmem:[%s175 + $0x1c] sm:%s167] %v190
                %v192 = vld [vmem:[%s174 + $0x40] sm:%s167]
                %193 = vst [vmem:[%s175 + $0x20] sm:%s167] %v192
                %v194 = vld [vmem:[%s174 + $0x48] sm:%s167]
                %195 = vst [vmem:[%s175 + $0x24] sm:%s167] %v194
                %v196 = vld [vmem:[%s174 + $0x50] sm:%s167]
                %197 = vst [vmem:[%s175 + $0x28] sm:%s167] %v196
                %v198 = vld [vmem:[%s174 + $0x58] sm:%s167]
                %199 = vst [vmem:[%s175 + $0x2c] sm:%s167] %v198
                %v200 = vld [vmem:[%s174 + $0x60] sm:%s167]
                %201 = vst [vmem:[%s175 + $0x30] sm:%s167] %v200
                %v202 = vld [vmem:[%s174 + $0x68] sm:%s167]
                %203 = vst [vmem:[%s175 + $0x34] sm:%s167] %v202
                %v204 = vld [vmem:[%s174 + $0x70] sm:%s167]
                %205 = vst [vmem:[%s175 + $0x38] sm:%s167] %v204
                %v206 = vld [vmem:[%s174 + $0x78] sm:%s167]
                %207 = vst [vmem:[%s175 + $0x3c] sm:%s167] %v206
                %v208 = vld [vmem:[%s174 + $0x80] sm:%s167]
                %209 = vst [vmem:[%s175 + $0x40] sm:%s167] %v208
                %v210 = vld [vmem:[%s174 + $0x88] sm:%s167]
                %211 = vst [vmem:[%s175 + $0x44] sm:%s167] %v210
                %v212 = vld [vmem:[%s174 + $0x90] sm:%s167]
                %213 = vst [vmem:[%s175 + $0x48] sm:%s167] %v212
                %v214 = vld [vmem:[%s174 + $0x98] sm:%s167]
                %215 = vst [vmem:[%s175 + $0x4c] sm:%s167] %v214
                %v216 = vld [vmem:[%s174 + $0xa0] sm:%s167]
                %217 = vst [vmem:[%s175 + $0x50] sm:%s167] %v216
                %v218 = vld [vmem:[%s174 + $0xa8] sm:%s167]
                %219 = vst [vmem:[%s175 + $0x54] sm:%s167] %v218
                %v220 = vld [vmem:[%s174 + $0xb0] sm:%s167]
                %221 = vst [vmem:[%s175 + $0x58] sm:%s167] %v220
                %v222 = vld [vmem:[%s174 + $0xb8] sm:%s167]
                %223 = vst [vmem:[%s175 + $0x5c] sm:%s167] %v222
                %v224 = vld [vmem:[%s174 + $0xc0] sm:%s167]
                %225 = vst [vmem:[%s175 + $0x60] sm:%s167] %v224
                %v226 = vld [vmem:[%s174 + $0xc8] sm:%s167]
                %227 = vst [vmem:[%s175 + $0x64] sm:%s167] %v226
                %v228 = vld [vmem:[%s174 + $0xd0] sm:%s167]
                %229 = vst [vmem:[%s175 + $0x68] sm:%s167] %v228
                %v230 = vld [vmem:[%s174 + $0xd8] sm:%s167]
                %231 = vst [vmem:[%s175 + $0x6c] sm:%s167] %v230
                %v232 = vld [vmem:[%s174 + $0xe0] sm:%s167]
                %233 = vst [vmem:[%s175 + $0x70] sm:%s167] %v232
                %v234 = vld [vmem:[%s174 + $0xe8] sm:%s167]
                %235 = vst [vmem:[%s175 + $0x74] sm:%s167] %v234
                %v236 = vld [vmem:[%s174 + $0xf0] sm:%s167]
                %237 = vst [vmem:[%s175 + $0x78] sm:%s167] %v236
                %v238 = vld [vmem:[%s174 + $0xf8] sm:%s167]
                %239 = vst [vmem:[%s175 + $0x7c] sm:%s167] %v238
                %v240 = vld [vmem:[%s174 + $0x100] sm:%s167]
                %241 = vst [vmem:[%s175 + $0x80] sm:%s167] %v240
                %v242 = vld [vmem:[%s174 + $0x108] sm:%s167]
                %243 = vst [vmem:[%s175 + $0x84] sm:%s167] %v242
                %v244 = vld [vmem:[%s174 + $0x110] sm:%s167]
                %245 = vst [vmem:[%s175 + $0x88] sm:%s167] %v244
                %v246 = vld [vmem:[%s174 + $0x118] sm:%s167]
                %247 = vst [vmem:[%s175 + $0x8c] sm:%s167] %v246
                %v248 = vld [vmem:[%s174 + $0x120] sm:%s167]
                %249 = vst [vmem:[%s175 + $0x90] sm:%s167] %v248
                %v250 = vld [vmem:[%s174 + $0x128] sm:%s167]
                %251 = vst [vmem:[%s175 + $0x94] sm:%s167] %v250
                %v252 = vld [vmem:[%s174 + $0x130] sm:%s167]
                %253 = vst [vmem:[%s175 + $0x98] sm:%s167] %v252
                %v254 = vld [vmem:[%s174 + $0x138] sm:%s167]
                %255 = vst [vmem:[%s175 + $0x9c] sm:%s167] %v254
                %v256 = vld [vmem:[%s174 + $0x140] sm:%s167]
                %257 = vst [vmem:[%s175 + $0xa0] sm:%s167] %v256
                %v258 = vld [vmem:[%s174 + $0x148] sm:%s167]
                %259 = vst [vmem:[%s175 + $0xa4] sm:%s167] %v258
                %v260 = vld [vmem:[%s174 + $0x150] sm:%s167]
                %261 = vst [vmem:[%s175 + $0xa8] sm:%s167] %v260
                %v262 = vld [vmem:[%s174 + $0x158] sm:%s167]
                %263 = vst [vmem:[%s175 + $0xac] sm:%s167] %v262
                %v264 = vld [vmem:[%s174 + $0x160] sm:%s167]
                %265 = vst [vmem:[%s175 + $0xb0] sm:%s167] %v264
                %v266 = vld [vmem:[%s174 + $0x168] sm:%s167]
                %267 = vst [vmem:[%s175 + $0xb4] sm:%s167] %v266
                %v268 = vld [vmem:[%s174 + $0x170] sm:%s167]
                %269 = vst [vmem:[%s175 + $0xb8] sm:%s167] %v268
                %v270 = vld [vmem:[%s174 + $0x178] sm:%s167]
                %271 = vst [vmem:[%s175 + $0xbc] sm:%s167] %v270
                %v272 = vld [vmem:[%s174 + $0x180] sm:%s167]
                %273 = vst [vmem:[%s175 + $0xc0] sm:%s167] %v272
                %v274 = vld [vmem:[%s174 + $0x188] sm:%s167]
                %275 = vst [vmem:[%s175 + $0xc4] sm:%s167] %v274
                %v276 = vld [vmem:[%s174 + $0x190] sm:%s167]
                %277 = vst [vmem:[%s175 + $0xc8] sm:%s167] %v276
                %v278 = vld [vmem:[%s174 + $0x198] sm:%s167]
                %279 = vst [vmem:[%s175 + $0xcc] sm:%s167] %v278
                %v280 = vld [vmem:[%s174 + $0x1a0] sm:%s167]
                %281 = vst [vmem:[%s175 + $0xd0] sm:%s167] %v280
                %v282 = vld [vmem:[%s174 + $0x1a8] sm:%s167]
                %283 = vst [vmem:[%s175 + $0xd4] sm:%s167] %v282
                %v284 = vld [vmem:[%s174 + $0x1b0] sm:%s167]
                %285 = vst [vmem:[%s175 + $0xd8] sm:%s167] %v284
                %v286 = vld [vmem:[%s174 + $0x1b8] sm:%s167]
                %287 = vst [vmem:[%s175 + $0xdc] sm:%s167] %v286
                %v288 = vld [vmem:[%s174 + $0x1c0] sm:%s167]
                %289 = vst [vmem:[%s175 + $0xe0] sm:%s167] %v288
                %v290 = vld [vmem:[%s174 + $0x1c8] sm:%s167]
                %291 = vst [vmem:[%s175 + $0xe4] sm:%s167] %v290
                %v292 = vld [vmem:[%s174 + $0x1d0] sm:%s167]
                %293 = vst [vmem:[%s175 + $0xe8] sm:%s167] %v292
                %v294 = vld [vmem:[%s174 + $0x1d8] sm:%s167]
                %295 = vst [vmem:[%s175 + $0xec] sm:%s167] %v294
                %v296 = vld [vmem:[%s174 + $0x1e0] sm:%s167]
                %297 = vst [vmem:[%s175 + $0xf0] sm:%s167] %v296
                %v298 = vld [vmem:[%s174 + $0x1e8] sm:%s167]
                %299 = vst [vmem:[%s175 + $0xf4] sm:%s167] %v298
                %v300 = vld [vmem:[%s174 + $0x1f0] sm:%s167]
                %301 = vst [vmem:[%s175 + $0xf8] sm:%s167] %v300
                %v302 = vld [vmem:[%s174 + $0x1f8] sm:%s167]
                %303 = vst [vmem:[%s175 + $0xfc] sm:%s167] %v302
              $region41: #{anchor_aggregation.1} parent=35 // loop_footer
                %s173 = sadd.s32 1, %s169
              $region42: #{anchor_aggregation.1} parent=35 // loop_footer_branch
                %168 = sbr.rel target = $region38
              $region43: #{anchor_aggregation.1} parent=35 // loop_exit
                _
            $region36: #{anchor_aggregation.1} parent=27 // pred_fallthru
              _
          $region28: #{anchor_aggregation.1} parent=23 // pred_fallthru
            _
          %452 = vnop
        $region24: #{anchor_aggregation.1} parent=19 // pred_fallthru
          _
      $region20: #{anchor_aggregation.1} parent=5 // pred_fallthru
        _
      %p453 = scmp.le.s32.totalorder 1, %s11
      %p454 = scmp.lt.s32.totalorder %s11, 3
      %p455 = pnand %p453, %p454
      %p456 = pneg %p455
      // Predicated region
      $region62: #{anchor_aggregation.1} parent=5 // pred_check
        _
      $region63: #{anchor_aggregation.1} parent=5 // pred_check_branch
        %458 = sbr.rel (%p455) target = $region65
      $region64: #{anchor_aggregation.1} parent=5 // pred_region
        %s459 = ssub.s32 %s11, 1
        %s460 = sand.u32 %s73, 1
        %s461 = sand.u32 %s73, 1
        %s462 = smul.addr %s461, 256
        %s463 = scalar_lea.vmem [#allocation3], %s462
        // Predicated region
        $region66: #{anchor_aggregation.1} parent=64 // pred_check
          %p464 = pneg %p86
        $region67: #{anchor_aggregation.1} parent=64 // pred_check_branch
          %466 = sbr.rel (%p464) target = $region69
        $region68: #{anchor_aggregation.1} parent=64 // pred_region
          _
        $region69: #{anchor_aggregation.1} parent=64 // pred_fallthru
          _
        %s467 = smul.u32 4, %s21
        %s468 = smul.u32 4, %s23
        %p469 = scmp.lt.s32.totalorder %s467, 3
        %s470 = scalar_select %p469, %s467, 3
        %p471 = scmp.lt.s32.totalorder %s468, 3
        %s472 = scalar_select %p471, %s468, 3
        %s473 = smul.addr %s470, 4
        %s474 = sadd.s32 %s472, %s473
        %s475 = smul.addr %s474, 4
        %s476 = scalar_lea.vmem %s0, %s475
        %p477 = pneg %p58
        %p478 = pneg %p55
        %s479 = sand.u32 %s73, 1
        %s480 = sand.u32 %s73, 1
        %s481 = smul.addr %s480, 256
        %s482 = scalar_lea.vmem [#allocation3], %s481
        %p483 = pneg %p86
        %p484 = pneg %p83
        %p485 = pneg %p114
        %p486 = pneg %p111
        %s487 = sand.u32 %s101, 1
        %s488 = scalar_lea.sflag [#allocation5], %s487
        %s489 = sand.u32 %s101, 1
        %s490 = smul.addr %s489, 32
        %s491 = scalar_lea.vmem [#allocation4], %s490
        %s492 = smul.u32 4, %s21
        %s493 = smul.u32 4, %s23
        %p494 = scmp.lt.s32.totalorder %s492, 3
        %s495 = scalar_select %p494, %s492, 3
        %p496 = scmp.lt.s32.totalorder %s493, 3
        %s497 = scalar_select %p496, %s493, 3
        %s498 = smul.addr %s495, 4
        %s499 = sadd.s32 %s497, %s498
        %s500 = smul.addr %s499, 4
        %s501 = scalar_lea.vmem %s0, %s500
        %s502 = smul.u32 4, %s21
        %s503 = smul.u32 4, %s23
        %s504 = smul.u32 64, %s23
        %s505 = smul.u32 4, %s21
        %p506 = scmp.eq.s32.totalorder %s23, 0
        // Predicated region
        $region70: #{anchor_aggregation.1} parent=64 // pred_check
          %p507 = pneg %p506
        $region71: #{anchor_aggregation.1} parent=64 // pred_check_branch
          %509 = sbr.rel (%p507) target = $region73
        $region72: #{anchor_aggregation.1} parent=64 // pred_region
          %510 = vst [vmem:[#allocation2] sm:$0xff] 0.0
          %511 = vst [vmem:[#allocation2 + $0x8] sm:$0xff] 0.0
          %512 = vst [vmem:[#allocation2 + $0x10] sm:$0xff] 0.0
          %513 = vst [vmem:[#allocation2 + $0x18] sm:$0xff] 0.0
        $region73: #{anchor_aggregation.1} parent=64 // pred_fallthru
          _
        %v514 = vld [vmem:[#allocation2] sm:$0xff]
        %v515 = vld [vmem:[#allocation2 + $0x8] sm:$0xff]
        %v516 = vld [vmem:[#allocation2 + $0x10] sm:$0xff]
        %v517 = vld [vmem:[#allocation2 + $0x18] sm:$0xff]
        %v518 = vld [vmem:[%s501] sm:$0xff]
        %v519 = vld [vmem:[%s501 + $0x8] sm:$0xff]
        %v520 = vld [vmem:[%s501 + $0x10] sm:$0xff]
        %v521 = vld [vmem:[%s501 + $0x18] sm:$0xff]
        %v522 = vld [vmem:[%s501 + $0x20] sm:$0xff]
        %v523 = vld [vmem:[%s501 + $0x28] sm:$0xff]
        %v524 = vld [vmem:[%s501 + $0x30] sm:$0xff]
        %v525 = vld [vmem:[%s501 + $0x38] sm:$0xff]
        %v526 = vld [vmem:[%s463] sm:$0xf]
        %v527 = vld [vmem:[%s463 + $0x4] sm:$0xf]
        %v528 = vld [vmem:[%s463 + $0x8] sm:$0xf]
        %v529 = vld [vmem:[%s463 + $0xc] sm:$0xf]
        %v530 = vld [vmem:[%s463 + $0x10] sm:$0xf]
        %v531 = vld [vmem:[%s463 + $0x14] sm:$0xf]
        %v532 = vld [vmem:[%s463 + $0x18] sm:$0xf]
        %v533 = vld [vmem:[%s463 + $0x1c] sm:$0xf]
        %v534 = vld [vmem:[%s463 + $0x20] sm:$0xf]
        %v535 = vld [vmem:[%s463 + $0x24] sm:$0xf]
        %v536 = vld [vmem:[%s463 + $0x28] sm:$0xf]
        %v537 = vld [vmem:[%s463 + $0x2c] sm:$0xf]
        %v538 = vld [vmem:[%s463 + $0x30] sm:$0xf]
        %v539 = vld [vmem:[%s463 + $0x34] sm:$0xf]
        %v540 = vld [vmem:[%s463 + $0x38] sm:$0xf]
        %v541 = vld [vmem:[%s463 + $0x3c] sm:$0xf]
        %v542 = vld [vmem:[%s463 + $0x40] sm:$0xf]
        %v543 = vld [vmem:[%s463 + $0x44] sm:$0xf]
        %v544 = vld [vmem:[%s463 + $0x48] sm:$0xf]
        %v545 = vld [vmem:[%s463 + $0x4c] sm:$0xf]
        %v546 = vld [vmem:[%s463 + $0x50] sm:$0xf]
        %v547 = vld [vmem:[%s463 + $0x54] sm:$0xf]
        %v548 = vld [vmem:[%s463 + $0x58] sm:$0xf]
        %v549 = vld [vmem:[%s463 + $0x5c] sm:$0xf]
        %v550 = vld [vmem:[%s463 + $0x60] sm:$0xf]
        %v551 = vld [vmem:[%s463 + $0x64] sm:$0xf]
        %v552 = vld [vmem:[%s463 + $0x68] sm:$0xf]
        %v553 = vld [vmem:[%s463 + $0x6c] sm:$0xf]
        %v554 = vld [vmem:[%s463 + $0x70] sm:$0xf]
        %v555 = vld [vmem:[%s463 + $0x74] sm:$0xf]
        %v556 = vld [vmem:[%s463 + $0x78] sm:$0xf]
        %v557 = vld [vmem:[%s463 + $0x7c] sm:$0xf]
        %v558 = vld [vmem:[%s463 + $0x80] sm:$0xf]
        %v559 = vld [vmem:[%s463 + $0x84] sm:$0xf]
        %v560 = vld [vmem:[%s463 + $0x88] sm:$0xf]
        %v561 = vld [vmem:[%s463 + $0x8c] sm:$0xf]
        %v562 = vld [vmem:[%s463 + $0x90] sm:$0xf]
        %v563 = vld [vmem:[%s463 + $0x94] sm:$0xf]
        %v564 = vld [vmem:[%s463 + $0x98] sm:$0xf]
        %v565 = vld [vmem:[%s463 + $0x9c] sm:$0xf]
        %v566 = vld [vmem:[%s463 + $0xa0] sm:$0xf]
        %v567 = vld [vmem:[%s463 + $0xa4] sm:$0xf]
        %v568 = vld [vmem:[%s463 + $0xa8] sm:$0xf]
        %v569 = vld [vmem:[%s463 + $0xac] sm:$0xf]
        %v570 = vld [vmem:[%s463 + $0xb0] sm:$0xf]
        %v571 = vld [vmem:[%s463 + $0xb4] sm:$0xf]
        %v572 = vld [vmem:[%s463 + $0xb8] sm:$0xf]
        %v573 = vld [vmem:[%s463 + $0xbc] sm:$0xf]
        %v574 = vld [vmem:[%s463 + $0xc0] sm:$0xf]
        %v575 = vld [vmem:[%s463 + $0xc4] sm:$0xf]
        %v576 = vld [vmem:[%s463 + $0xc8] sm:$0xf]
        %v577 = vld [vmem:[%s463 + $0xcc] sm:$0xf]
        %v578 = vld [vmem:[%s463 + $0xd0] sm:$0xf]
        %v579 = vld [vmem:[%s463 + $0xd4] sm:$0xf]
        %v580 = vld [vmem:[%s463 + $0xd8] sm:$0xf]
        %v581 = vld [vmem:[%s463 + $0xdc] sm:$0xf]
        %v582 = vld [vmem:[%s463 + $0xe0] sm:$0xf]
        %v583 = vld [vmem:[%s463 + $0xe4] sm:$0xf]
        %v584 = vld [vmem:[%s463 + $0xe8] sm:$0xf]
        %v585 = vld [vmem:[%s463 + $0xec] sm:$0xf]
        %v586 = vld [vmem:[%s463 + $0xf0] sm:$0xf]
        %v587 = vld [vmem:[%s463 + $0xf4] sm:$0xf]
        %v588 = vld [vmem:[%s463 + $0xf8] sm:$0xf]
        %v589 = vld [vmem:[%s463 + $0xfc] sm:$0xf]
        %v598 = vunpack.c.l.b16 %v518
        %v599 = vunpack.c.h.b16 %v518
        %v600 = vunpack.c.l.b16 %v519
        %v601 = vunpack.c.h.b16 %v519
        %v602 = vunpack.c.l.b16 %v520
        %v603 = vunpack.c.h.b16 %v520
        %v604 = vunpack.c.l.b16 %v521
        %v605 = vunpack.c.h.b16 %v521
        %v606 = vunpack.c.l.b16 %v522
        %v607 = vunpack.c.h.b16 %v522
        %v608 = vunpack.c.l.b16 %v523
        %v609 = vunpack.c.h.b16 %v523
        %v610 = vunpack.c.l.b16 %v524
        %v611 = vunpack.c.h.b16 %v524
        %v612 = vunpack.c.l.b16 %v525
        %v613 = vunpack.c.h.b16 %v525
        %v614 = vpack.c.b16 %v602, %v598
        %v615 = vpack.c.b16 %v603, %v599
        %v616 = vpack.c.b16 %v604, %v600
        %v617 = vpack.c.b16 %v605, %v601
        %v618 = vpack.c.b16 %v610, %v606
        %v619 = vpack.c.b16 %v611, %v607
        %v620 = vpack.c.b16 %v612, %v608
        %v621 = vpack.c.b16 %v613, %v609
        %v694 = vunpack.c.l.b16 %v526
        %v695 = vunpack.c.l.b16 %v527
        %v696 = vunpack.c.l.b16 %v528
        %v697 = vunpack.c.l.b16 %v529
        %v698 = vunpack.c.l.b16 %v530
        %v699 = vunpack.c.l.b16 %v531
        %v700 = vunpack.c.l.b16 %v532
        %v701 = vunpack.c.l.b16 %v533
        %v702 = vunpack.c.l.b16 %v534
        %v703 = vunpack.c.l.b16 %v535
        %v704 = vunpack.c.l.b16 %v536
        %v705 = vunpack.c.l.b16 %v537
        %v706 = vunpack.c.l.b16 %v538
        %v707 = vunpack.c.l.b16 %v539
        %v708 = vunpack.c.l.b16 %v540
        %v709 = vunpack.c.l.b16 %v541
        %v710 = vunpack.c.l.b16 %v542
        %v711 = vunpack.c.l.b16 %v543
        %v712 = vunpack.c.l.b16 %v544
        %v713 = vunpack.c.l.b16 %v545
        %v714 = vunpack.c.l.b16 %v546
        %v715 = vunpack.c.l.b16 %v547
        %v716 = vunpack.c.l.b16 %v548
        %v717 = vunpack.c.l.b16 %v549
        %v718 = vunpack.c.l.b16 %v550
        %v719 = vunpack.c.l.b16 %v551
        %v720 = vunpack.c.l.b16 %v552
        %v721 = vunpack.c.l.b16 %v553
        %v722 = vunpack.c.l.b16 %v554
        %v723 = vunpack.c.l.b16 %v555
        %v724 = vunpack.c.l.b16 %v556
        %v725 = vunpack.c.l.b16 %v557
        %v726 = vunpack.c.l.b16 %v558
        %v727 = vunpack.c.l.b16 %v559
        %v728 = vunpack.c.l.b16 %v560
        %v729 = vunpack.c.l.b16 %v561
        %v730 = vunpack.c.l.b16 %v562
        %v731 = vunpack.c.l.b16 %v563
        %v732 = vunpack.c.l.b16 %v564
        %v733 = vunpack.c.l.b16 %v565
        %v734 = vunpack.c.l.b16 %v566
        %v735 = vunpack.c.l.b16 %v567
        %v736 = vunpack.c.l.b16 %v568
        %v737 = vunpack.c.l.b16 %v569
        %v738 = vunpack.c.l.b16 %v570
        %v739 = vunpack.c.l.b16 %v571
        %v740 = vunpack.c.l.b16 %v572
        %v741 = vunpack.c.l.b16 %v573
        %v742 = vunpack.c.l.b16 %v574
        %v743 = vunpack.c.l.b16 %v575
        %v744 = vunpack.c.l.b16 %v576
        %v745 = vunpack.c.l.b16 %v577
        %v746 = vunpack.c.l.b16 %v578
        %v747 = vunpack.c.l.b16 %v579
        %v748 = vunpack.c.l.b16 %v580
        %v749 = vunpack.c.l.b16 %v581
        %v750 = vunpack.c.l.b16 %v582
        %v751 = vunpack.c.l.b16 %v583
        %v752 = vunpack.c.l.b16 %v584
        %v753 = vunpack.c.l.b16 %v585
        %v754 = vunpack.c.l.b16 %v586
        %v755 = vunpack.c.l.b16 %v587
        %v756 = vunpack.c.l.b16 %v588
        %v757 = vunpack.c.l.b16 %v589
        %v758 = vpack.c.b16 %v695, %v694
        %v759 = vpack.c.b16 %v697, %v696
        %v760 = vpack.c.b16 %v699, %v698
        %v761 = vpack.c.b16 %v701, %v700
        %v762 = vpack.c.b16 %v703, %v702
        %v763 = vpack.c.b16 %v705, %v704
        %v764 = vpack.c.b16 %v707, %v706
        %v765 = vpack.c.b16 %v709, %v708
        %v766 = vpack.c.b16 %v711, %v710
        %v767 = vpack.c.b16 %v713, %v712
        %v768 = vpack.c.b16 %v715, %v714
        %v769 = vpack.c.b16 %v717, %v716
        %v770 = vpack.c.b16 %v719, %v718
        %v771 = vpack.c.b16 %v721, %v720
        %v772 = vpack.c.b16 %v723, %v722
        %v773 = vpack.c.b16 %v725, %v724
        %v774 = vpack.c.b16 %v727, %v726
        %v775 = vpack.c.b16 %v729, %v728
        %v776 = vpack.c.b16 %v731, %v730
        %v777 = vpack.c.b16 %v733, %v732
        %v778 = vpack.c.b16 %v735, %v734
        %v779 = vpack.c.b16 %v737, %v736
        %v780 = vpack.c.b16 %v739, %v738
        %v781 = vpack.c.b16 %v741, %v740
        %v782 = vpack.c.b16 %v743, %v742
        %v783 = vpack.c.b16 %v745, %v744
        %v784 = vpack.c.b16 %v747, %v746
        %v785 = vpack.c.b16 %v749, %v748
        %v786 = vpack.c.b16 %v751, %v750
        %v787 = vpack.c.b16 %v753, %v752
        %v788 = vpack.c.b16 %v755, %v754
        %v789 = vpack.c.b16 %v757, %v756
        %822 = vmatpush.bf16.msra.mxu0 %v765
        %823 = vmatpush.bf16.msra.mxu0 %v764
        %824 = vmatpush.bf16.msra.mxu0 %v763
        %825 = vmatpush.bf16.msra.mxu0 %v762
        %826 = vmatpush.bf16.msra.mxu0 %v761
        %827 = vmatpush.bf16.msra.mxu0 %v760
        %828 = vmatpush.bf16.msra.mxu0 %v759
        %829 = vmatpush.bf16.msra.mxu0 %v758
        %830 = vmatmul.bf16.gmra.mxu0 %v614
        %v831 = vpop.f32.mrf.mxu0
        %v832 = vadd.f32 0.0, %v831
        %v833 = vpop.f32.mrf.mxu0
        %v834 = vadd.f32 0.0, %v833
        %835 = vmatmul.bf16.gmra.mxu0 %v618
        %v836 = vpop.f32.mrf.mxu0
        %v837 = vadd.f32 0.0, %v836
        %v838 = vpop.f32.mrf.mxu0
        %v839 = vadd.f32 0.0, %v838
        %840 = vdwg.mxu0
        %841 = vmatpush.bf16.msra.mxu0 %v773
        %842 = vmatpush.bf16.msra.mxu0 %v772
        %843 = vmatpush.bf16.msra.mxu0 %v771
        %844 = vmatpush.bf16.msra.mxu0 %v770
        %845 = vmatpush.bf16.msra.mxu0 %v769
        %846 = vmatpush.bf16.msra.mxu0 %v768
        %847 = vmatpush.bf16.msra.mxu0 %v767
        %848 = vmatpush.bf16.msra.mxu0 %v766
        %849 = vmatmul.bf16.gmra.mxu0 %v615
        %v850 = vpop.f32.mrf.mxu0
        %v851 = vadd.f32 %v832, %v850
        %v852 = vpop.f32.mrf.mxu0
        %v853 = vadd.f32 %v834, %v852
        %854 = vmatmul.bf16.gmra.mxu0 %v619
        %v855 = vpop.f32.mrf.mxu0
        %v856 = vadd.f32 %v837, %v855
        %v857 = vpop.f32.mrf.mxu0
        %v858 = vadd.f32 %v839, %v857
        %859 = vdwg.mxu0
        %860 = vmatpush.bf16.msra.mxu0 %v781
        %861 = vmatpush.bf16.msra.mxu0 %v780
        %862 = vmatpush.bf16.msra.mxu0 %v779
        %863 = vmatpush.bf16.msra.mxu0 %v778
        %864 = vmatpush.bf16.msra.mxu0 %v777
        %865 = vmatpush.bf16.msra.mxu0 %v776
        %866 = vmatpush.bf16.msra.mxu0 %v775
        %867 = vmatpush.bf16.msra.mxu0 %v774
        %868 = vmatmul.bf16.gmra.mxu0 %v616
        %v869 = vpop.f32.mrf.mxu0
        %v870 = vadd.f32 %v851, %v869
        %v871 = vpop.f32.mrf.mxu0
        %v872 = vadd.f32 %v853, %v871
        %873 = vmatmul.bf16.gmra.mxu0 %v620
        %v874 = vpop.f32.mrf.mxu0
        %v875 = vadd.f32 %v856, %v874
        %v876 = vpop.f32.mrf.mxu0
        %v877 = vadd.f32 %v858, %v876
        %878 = vdwg.mxu0
        %879 = vmatpush.bf16.msra.mxu0 %v789
        %880 = vmatpush.bf16.msra.mxu0 %v788
        %881 = vmatpush.bf16.msra.mxu0 %v787
        %882 = vmatpush.bf16.msra.mxu0 %v786
        %883 = vmatpush.bf16.msra.mxu0 %v785
        %884 = vmatpush.bf16.msra.mxu0 %v784
        %885 = vmatpush.bf16.msra.mxu0 %v783
        %886 = vmatpush.bf16.msra.mxu0 %v782
        %887 = vmatmul.bf16.gmra.mxu0 %v617
        %v888 = vpop.f32.mrf.mxu0
        %v889 = vadd.f32 %v870, %v888
        %v890 = vpop.f32.mrf.mxu0
        %v891 = vadd.f32 %v872, %v890
        %892 = vmatmul.bf16.gmra.mxu0 %v621
        %v893 = vpop.f32.mrf.mxu0
        %v894 = vadd.f32 %v875, %v893
        %v895 = vpop.f32.mrf.mxu0
        %v896 = vadd.f32 %v877, %v895
        %897 = vdwg.mxu0
        %v898 = vadd.f32 %v514, %v889
        %v899 = vadd.f32 %v515, %v891
        %v900 = vadd.f32 %v516, %v894
        %v901 = vadd.f32 %v517, %v896
        %902 = vst [vmem:[#allocation2] sm:$0xff] %v898
        %903 = vst [vmem:[#allocation2 + $0x8] sm:$0xff] %v899
        %904 = vst [vmem:[#allocation2 + $0x10] sm:$0xff] %v900
        %905 = vst [vmem:[#allocation2 + $0x18] sm:$0xff] %v901
        // Predicated region
        $region74: #{anchor_aggregation.1} parent=64 // pred_check
          %p906 = pneg %p506
        $region75: #{anchor_aggregation.1} parent=64 // pred_check_branch
          %908 = sbr.rel (%p906) target = $region77
        $region76: #{anchor_aggregation.1} parent=64 // pred_region
          %v909 = vld [vmem:[#allocation2] sm:$0xff]
          %v910 = vld [vmem:[#allocation2 + $0x8] sm:$0xff]
          %v911 = vld [vmem:[#allocation2 + $0x10] sm:$0xff]
          %v912 = vld [vmem:[#allocation2 + $0x18] sm:$0xff]
          %vm913 = vcmp.ge.f32.partialorder %v909, 0.0
          %vm914 = vcmp.ge.f32.partialorder %v910, 0.0
          %vm915 = vcmp.ge.f32.partialorder %v911, 0.0
          %vm916 = vcmp.ge.f32.partialorder %v912, 0.0
          %v917 = vmul.f32 %v909, 0.1
          %v918 = vmul.f32 %v910, 0.1
          %v919 = vmul.f32 %v911, 0.1
          %v920 = vmul.f32 %v912, 0.1
          %v921 = vsel %vm913, %v909, %v917
          %v922 = vsel %vm914, %v910, %v918
          %v923 = vsel %vm915, %v911, %v919
          %v924 = vsel %vm916, %v912, %v920
          %925 = vst [vmem:[%s491] sm:$0xff] %v921
          %926 = vst [vmem:[%s491 + $0x8] sm:$0xff] %v922
          %927 = vst [vmem:[%s491 + $0x10] sm:$0xff] %v923
          %928 = vst [vmem:[%s491 + $0x18] sm:$0xff] %v924
        $region77: #{anchor_aggregation.1} parent=64 // pred_fallthru
          _
        %s929 = sand.u32 %s101, 1
        %s930 = scalar_lea.sflag [#allocation5], %s929
        %s931 = sand.u32 %s101, 1
        %s932 = smul.addr %s931, 32
        %s933 = scalar_lea.vmem [#allocation4], %s932
        // Predicated region
        $region78: #{anchor_aggregation.1} parent=64 // pred_check
          %p934 = pneg %p111
        $region79: #{anchor_aggregation.1} parent=64 // pred_check_branch
          %936 = sbr.rel (%p934) target = $region81
        $region80: #{anchor_aggregation.1} parent=64 // pred_region
          %s937 = smul.u32 4, %s21
          %939 = vsyncadd %s930, 0
          %s940 = smul.addr %s937, 2
          %s941 = sadd.s32 %s22, %s940
          %s942 = smul.addr %s941, 8
          %s943 = scalar_lea.hbm %s2, %s942
          %s944 = sshll.u32 %s933, 4
          %s945 = int_to_ptr.vmem [resolvable:$true] %s944
          %s946 = sshll.u32 %s943, 4
          %s947 = int_to_ptr.hbm [resolvable:$true] %s946
          %952 = dma.vmem_to_hbm [thread:$0]  %s945, 512, %s947, %s930, 128, 256, 8
        $region81: #{anchor_aggregation.1} parent=64 // pred_fallthru
          _
      $region65: #{anchor_aggregation.1} parent=5 // pred_fallthru
        _
      %p953 = scmp.le.s32.totalorder 2, %s11
      // Predicated region
      $region82: #{anchor_aggregation.1} parent=5 // pred_check
        %p954 = pneg %p953
      $region83: #{anchor_aggregation.1} parent=5 // pred_check_branch
        %956 = sbr.rel (%p954) target = $region85
      $region84: #{anchor_aggregation.1} parent=5 // pred_region
        %s957 = ssub.s32 %s11, 2
        // Predicated region
        $region86: #{anchor_aggregation.1} parent=84 // pred_check
          %p958 = pneg %p117
        $region87: #{anchor_aggregation.1} parent=84 // pred_check_branch
          %960 = sbr.rel (%p958) target = $region89
        $region88: #{anchor_aggregation.1} parent=84 // pred_region
          %s961 = sand.u32 %s102, 1
          %s962 = scalar_lea.sflag [#allocation5], %s961
          %s963 = sand.u32 %s102, 1
          %s964 = smul.addr %s963, 32
          %s965 = scalar_lea.vmem [#allocation4], %s964
          %967 = dma.done %s962, 512
        $region89: #{anchor_aggregation.1} parent=84 // pred_fallthru
          _
      $region85: #{anchor_aggregation.1} parent=5 // pred_fallthru
        _
    $region6: #{anchor_aggregation.1} parent=1 // loop_footer
      %s15 = sadd.s32 1, %s11
    $region7: #{anchor_aggregation.1} parent=1 // loop_footer_branch
      %10 = sbr.rel target = $region3
    $region8: #{anchor_aggregation.1} parent=1 // loop_exit
      _
    %968 = vsyncpa [#allocation5], 1
    %s969 = scalar_lea.sflag [#allocation5], 1
    %970 = vsyncpa %s969, 1

</llo_original>
